<compile_context>
chip_gen: v7x
topology: tpu7x:2x2x1
jax: 0.10.0
libtpu: 0.0.40
codegen_flags: <defaults>
</compile_context>

<pallas_src>
import functools
import math

import jax
import jax.numpy as jnp
from jax import lax
from jax.experimental import pallas as pl
from jax.experimental.pallas import tpu as pltpu

NEG_INF = -1e30  # large finite negative: avoids inf-inf NaN hazards in masked tiles


def _round_up(x, m):
    return ((x + m - 1) // m) * m


def _vmem_limit_bytes(default=48 * 1024 * 1024):
    """Generation-aware VMEM limit: ~75% of physical per-core VMEM, else 48 MiB."""
    try:
        info = pltpu.get_tpu_info()
        cap = getattr(info, "vmem_capacity_bytes", None)
        if cap:
            return int(cap) * 3 // 4
    except Exception:
        pass
    return default


def _pick_row_tile(total_rows, target):
    """Largest multiple of 8 <= target that divides total_rows (total_rows % 8 == 0)."""
    t = max(8, (min(target, total_rows) // 8) * 8)
    while total_rows % t:
        t -= 8
    return t


def _pick_n_tile(total, target=1536):
    """Output-column tile for the QKV projection weight: full width if small, else the
    largest multiple of 128 <= target dividing total (fallback: full width)."""
    if total <= target:
        return total
    for cand in range((target // 128) * 128, 127, -128):
        if total % cand == 0:
            return cand
    return total


# --------------------------------------------------------------------------- #
# Kernel 1: QKV projection  (rows, C) @ (C, tn) + bias  -- N-tiled weight
# --------------------------------------------------------------------------- #
def _matmul_bias_kernel(x_ref, w_ref, b_ref, o_ref):
    # x_ref: (rows, C); w_ref: (C, tn); b_ref: (1, tn); o_ref: (rows, tn)
    acc = jnp.dot(x_ref[...], w_ref[...], preferred_element_type=jnp.float32)
    o_ref[...] = (acc + b_ref[...].astype(jnp.float32)).astype(o_ref.dtype)


# --------------------------------------------------------------------------- #
# Kernel 2: flash attention, triangular (i, j) pair schedule, online softmax
# --------------------------------------------------------------------------- #
def _flash_attn_kernel(i_map_ref, j_map_ref, mask_map_ref, last_map_ref,
                       q_ref, k_ref, v_ref, o_ref,
                       m_ref, l_ref, acc_ref, *, block_q, block_k):
    # q_ref: (block_q, D); k_ref/v_ref: (block_k, D); o_ref: (block_q, D)
    t = pl.program_id(2)          # flattened lower-triangular pair index
    i = i_map_ref[t]              # query-tile index
    j = j_map_ref[t]              # key-tile index

    @pl.when(j == 0)
    def _init():
        m_ref[...] = jnp.full_like(m_ref, NEG_INF)
        l_ref[...] = jnp.zeros_like(l_ref)
        acc_ref[...] = jnp.zeros_like(acc_ref)

    def _process(apply_mask):
        q = q_ref[...]                                   # scale folded into Wq
        k = k_ref[...]
        v = v_ref[...]
        s = lax.dot_general(q, k, (((1,), (1,)), ((), ())),
                            preferred_element_type=jnp.float32)   # (bq, bk) f32
        if apply_mask:
            # Absolute indices: valid for block_k != block_q.  block_k is a multiple of
            # block_q, so every scheduled tile has >= 1 unmasked entry per row, and
            # right-padded keys are always masked for real queries.
            row = i * block_q + lax.broadcasted_iota(jnp.int32, s.shape, 0)
            col = j * block_k + lax.broadcasted_iota(jnp.int32, s.shape, 1)
            s = jnp.where(row >= col, s, NEG_INF)
        m_prev = m_ref[...]
        m_new = jnp.maximum(m_prev, jnp.max(s, axis=-1, keepdims=True))
        alpha = jnp.exp(m_prev - m_new)
        p = jnp.exp(s - m_new)
        l_ref[...] = alpha * l_ref[...] + jnp.sum(p, axis=-1, keepdims=True)
        acc_ref[...] = alpha * acc_ref[...] + jnp.dot(
            p.astype(v.dtype), v, preferred_element_type=jnp.float32)
        m_ref[...] = m_new

    @pl.when(mask_map_ref[t] == 0)
    def _off_diag():
        _process(apply_mask=False)

    @pl.when(mask_map_ref[t] == 1)
    def _diag():
        _process(apply_mask=True)

    @pl.when(last_map_ref[t] == 1)
    def _finalize():
        inv_l = pl.reciprocal(l_ref[...], approx=True)   # EUP, not VALU divide
        o_ref[...] = (acc_ref[...] * inv_l).astype(o_ref.dtype)


# --------------------------------------------------------------------------- #
# Kernel 3: output projection fused with head recombine (H is a reduction axis)
# --------------------------------------------------------------------------- #
def _out_proj_kernel(y_ref, w_ref, b_ref, o_ref, acc_ref):
    # y_ref: (rows, D); w_ref: (D, C); b_ref: (1, C); o_ref: (rows, C)
    h = pl.program_id(2)

    @pl.when(h == 0)
    def _init():
        acc_ref[...] = jnp.zeros_like(acc_ref)

    acc_ref[...] += jnp.dot(y_ref[...], w_ref[...], preferred_element_type=jnp.float32)

    @pl.when(h == pl.num_programs(2) - 1)
    def _finalize():
        o_ref[...] = (acc_ref[...] + b_ref[...].astype(jnp.float32)).astype(o_ref.dtype)


# --------------------------------------------------------------------------- #
# Wrapper
# --------------------------------------------------------------------------- #
def causal_self_attention(x, w_attn, b_attn, w_proj, b_proj, *, n_head,
                          compute_dtype=jnp.bfloat16, block_q=128, block_k=256,
                          proj_rows=512):
    """x: (B, T, C); w_attn: (3C, C) (PyTorch layout); w_proj: (C, C)."""
    B, T, C = x.shape
    assert C % n_head == 0
    H = n_head
    D = C // H
    out_dtype = x.dtype
    compute_dtype = jnp.dtype(compute_dtype)
    itemsize = compute_dtype.itemsize

    # ---- sequence tiling ------------------------------------------------------
    bq = min(block_q, _round_up(T, 8))
    bk = min(block_k, _round_up(T, 8))
    bk = max(bq, (bk // bq) * bq)           # block_k a multiple of block_q (see kernel)
    T_pad = _round_up(T, bk)                # also a multiple of bq
    nq, nk = T_pad // bq, T_pad // bk
    if T_pad != T:
        # Padding is appended at the end: padded keys are masked by causality for every
        # real query; padded query rows compute finite garbage and are sliced off.
        x = jnp.pad(x, ((0, 0), (0, T_pad - T), (0, 0)))
    x = x.astype(compute_dtype)

    # ---- weights: transpose to (in, out); fold 1/sqrt(D) into Q columns --------
    scale = 1.0 / math.sqrt(D)
    wqkv = jnp.asarray(w_attn, jnp.float32).T            # (C, 3C); cols [0:C] = Q
    bqkv = jnp.asarray(b_attn, jnp.float32)
    wqkv = wqkv.at[:, :C].multiply(scale)
    bqkv = bqkv.at[:C].multiply(scale)
    wqkv = wqkv.astype(compute_dtype)
    bqkv = bqkv.reshape(1, 3 * C)                        # bias stays f32
    wproj = jnp.asarray(w_proj, jnp.float32).T.astype(compute_dtype)   # (C_in, C_out)
    bproj = jnp.asarray(b_proj, jnp.float32).reshape(1, C)

    vmem_limit = _vmem_limit_bytes()

    # ---- 1) QKV projection: (B, T_pad, 3C), N-tiled weight ----------------------
    pr = _pick_row_tile(T_pad, proj_rows)
    n_rows = T_pad // pr
    tn = _pick_n_tile(3 * C)
    n_n = (3 * C) // tn
    qkv_cost = pl.CostEstimate(
        flops=int(2 * B * T_pad * C * 3 * C), transcendentals=0,
        bytes_accessed=int((B * T_pad * C + C * 3 * C + B * T_pad * 3 * C) * itemsize))
    qkv = pl.pallas_call(
        _matmul_bias_kernel,
        out_shape=jax.ShapeDtypeStruct((B, T_pad, 3 * C), compute_dtype),
        grid=(B, n_rows, n_n),
        in_specs=[
            pl.BlockSpec((None, pr, C), lambda b, i, n: (b, i, 0)),
            pl.BlockSpec((C, tn), lambda b, i, n: (0, n)),
            pl.BlockSpec((1, tn), lambda b, i, n: (0, n)),
        ],
        out_specs=pl.BlockSpec((None, pr, tn), lambda b, i, n: (b, i, n)),
        compiler_params=pltpu.CompilerParams(
            dimension_semantics=("parallel", "parallel", "parallel"),
            vmem_limit_bytes=vmem_limit),
        cost_estimate=qkv_cost,
    )(x, wqkv, bqkv)

    # ---- 2) flash attention: triangular (i, j) pair schedule --------------------
    pairs_i, pairs_j, pairs_mask, pairs_last = [], [], [], []
    for i in range(nq):
        last_j = min(nk - 1, ((i + 1) * bq - 1) // bk)
        for j in range(last_j + 1):
            pairs_i.append(i)
            pairs_j.append(j)
            pairs_mask.append(1 if (j + 1) * bk - 1 > i * bq else 0)
            pairs_last.append(1 if j == last_j else 0)
    n_pairs = len(pairs_i)
    i_map = jnp.asarray(pairs_i, jnp.int32)
    j_map = jnp.asarray(pairs_j, jnp.int32)
    mask_map = jnp.asarray(pairs_mask, jnp.int32)
    last_map = jnp.asarray(pairs_last, jnp.int32)

    attn_kernel = functools.partial(_flash_attn_kernel, block_q=bq, block_k=bk)
    attn_scratch = [
        pltpu.VMEM((bq, 1), jnp.float32),    # m (running max)
        pltpu.VMEM((bq, 1), jnp.float32),    # l (running denom)
        pltpu.VMEM((bq, D), jnp.float32),    # acc (unnormalized output)
    ]
    attn_params = pltpu.CompilerParams(
        dimension_semantics=("parallel", "parallel", "arbitrary"),
        vmem_limit_bytes=vmem_limit)
    attn_cost = pl.CostEstimate(
        flops=int(4 * B * H * n_pairs * bq * bk * D),
        transcendentals=int(B * H * n_pairs * bq * bk),
        bytes_accessed=int(B * H * (n_pairs * (bq + 2 * bk) * D + T_pad * D) * itemsize))
    attn_out_shape = jax.ShapeDtypeStruct((B, H, T_pad, D), compute_dtype)

    if D % 128 == 0:
        # Direct feed from the (B, T_pad, 3C) qkv buffer: head slices are lane-offset
        # block indices h / H+h / 2H+h -- no split/reshape/transpose HBM round trip.
        grid_spec = pltpu.PrefetchScalarGridSpec(
            num_scalar_prefetch=4, grid=(B, H, n_pairs),
            in_specs=[
                pl.BlockSpec((None, bq, D),
                             lambda b, h, t, im, jm, mm, lm: (b, im[t], h)),
                pl.BlockSpec((None, bk, D),
                             lambda b, h, t, im, jm, mm, lm: (b, jm[t], H + h)),
                pl.BlockSpec((None, bk, D),
                             lambda b, h, t, im, jm, mm, lm: (b, jm[t], 2 * H + h)),
            ],
            out_specs=pl.BlockSpec((None, None, bq, D),
                                   lambda b, h, t, im, jm, mm, lm: (b, h, im[t], 0)),
            scratch_shapes=attn_scratch)
        y = pl.pallas_call(attn_kernel, out_shape=attn_out_shape, grid_spec=grid_spec,
                           compiler_params=attn_params, cost_estimate=attn_cost,
                           )(i_map, j_map, mask_map, last_map, qkv, qkv, qkv)
    else:
        # Fallback for D not a multiple of 128: one XLA-side relayout to (3, B, H, T, D).
        qkvh = qkv.reshape(B, T_pad, 3, H, D).transpose(2, 0, 3, 1, 4)
        q, k, v = qkvh[0], qkvh[1], qkvh[2]
        grid_spec = pltpu.PrefetchScalarGridSpec(
            num_scalar_prefetch=4, grid=(B, H, n_pairs),
            in_specs=[
                pl.BlockSpec((None, None, bq, D),
                             lambda b, h, t, im, jm, mm, lm: (b, h, im[t], 0)),
                pl.BlockSpec((None, None, bk, D),
                             lambda b, h, t, im, jm, mm, lm: (b, h, jm[t], 0)),
                pl.BlockSpec((None, None, bk, D),
                             lambda b, h, t, im, jm, mm, lm: (b, h, jm[t], 0)),
            ],
            out_specs=pl.BlockSpec((None, None, bq, D),
                                   lambda b, h, t, im, jm, mm, lm: (b, h, im[t], 0)),
            scratch_shapes=attn_scratch)
        y = pl.pallas_call(attn_kernel, out_shape=attn_out_shape, grid_spec=grid_spec,
                           compiler_params=attn_params, cost_estimate=attn_cost,
                           )(i_map, j_map, mask_map, last_map, q, k, v)

    # ---- 3) output projection fused with head recombine (no y transpose) --------
    pr_o = _pick_row_tile(T_pad, proj_rows)
    n_rows_o = T_pad // pr_o
    proj_cost = pl.CostEstimate(
        flops=int(2 * B * T_pad * C * C), transcendentals=0,
        bytes_accessed=int((2 * B * T_pad * C + C * C) * itemsize))
    out = pl.pallas_call(
        _out_proj_kernel,
        out_shape=jax.ShapeDtypeStruct((B, T_pad, C), out_dtype),
        grid=(B, n_rows_o, H),
        in_specs=[
            pl.BlockSpec((None, None, pr_o, D), lambda b, i, h: (b, h, i, 0)),
            pl.BlockSpec((D, C), lambda b, i, h: (h, 0)),
            pl.BlockSpec((1, C), lambda b, i, h: (0, 0)),
        ],
        out_specs=pl.BlockSpec((None, pr_o, C), lambda b, i, h: (b, i, 0)),
        scratch_shapes=[pltpu.VMEM((pr_o, C), jnp.float32)],
        compiler_params=pltpu.CompilerParams(
            dimension_semantics=("parallel", "parallel", "arbitrary"),
            vmem_limit_bytes=vmem_limit),
        cost_estimate=proj_cost,
    )(y, wproj, bproj)

    return out[:, :T, :]


# --------------------------------------------------------------------------- #
# Pure-JAX reference (mirror of the PyTorch forward, eval mode)
# --------------------------------------------------------------------------- #
def reference_attention(x, w_attn, b_attn, w_proj, b_proj, n_head):
    B, T, C = x.shape
    D = C // n_head
    qkv = x @ w_attn.T + b_attn
    q, k, v = jnp.split(qkv, 3, axis=2)
    q = q.reshape(B, T, n_head, D).transpose(0, 2, 1, 3)
    k = k.reshape(B, T, n_head, D).transpose(0, 2, 1, 3)
    v = v.reshape(B, T, n_head, D).transpose(0, 2, 1, 3)
    att = (q @ jnp.swapaxes(k, -2, -1)) * (1.0 / math.sqrt(D))
    mask = jnp.tril(jnp.ones((T, T), dtype=bool))
    att = jnp.where(mask[None, None], att, -jnp.inf)
    att = jax.nn.softmax(att, axis=-1)
    y = att @ v
    y = y.transpose(0, 2, 1, 3).reshape(B, T, C)
    return y @ w_proj.T + b_proj


if __name__ == "__main__":
    key = jax.random.PRNGKey(0)

    def make_params(k, C):
        k1, k2, k3, k4 = jax.random.split(k, 4)
        bound = 1.0 / math.sqrt(C)  # nn.Linear default init range
        w_attn = jax.random.uniform(k1, (3 * C, C), jnp.float32, -bound, bound)
        b_attn = jax.random.uniform(k2, (3 * C,), jnp.float32, -bound, bound)
        w_proj = jax.random.uniform(k3, (C, C), jnp.float32, -bound, bound)
        b_proj = jax.random.uniform(k4, (C,), jnp.float32, -bound, bound)
        return w_attn, b_attn, w_proj, b_proj

    # --- test 1: small shape (D=8 -> head-layout fallback path) -----------------
    B, T, C, n_head = 2, 8, 32, 4
    kx, kp, krest = jax.random.split(key, 3)
    x = jax.random.normal(kx, (B, T, C), dtype=jnp.float32)
    w_attn, b_attn, w_proj, b_proj = make_params(kp, C)
    ref = reference_attention(x, w_attn, b_attn, w_proj, b_proj, n_head)

    out_f32 = causal_self_attention(x, w_attn, b_attn, w_proj, b_proj,
                                    n_head=n_head, compute_dtype=jnp.float32)
    out_f32 = jax.block_until_ready(out_f32)
    assert out_f32.shape == (B, T, C)
    assert jnp.allclose(out_f32, ref, rtol=2e-3, atol=2e-3), "f32 kernel mismatch"

    out_bf16 = causal_self_attention(x, w_attn, b_attn, w_proj, b_proj,
                                     n_head=n_head)  # default bf16 MXU operands
    out_bf16 = jax.block_until_ready(out_bf16)
    assert jnp.allclose(out_bf16, ref, rtol=5e-2, atol=5e-2), "bf16 kernel mismatch"

    # --- test 2: D=128 exercises direct-qkv feed, triangular schedule, bk=2*bq ---
    B2, T2, C2, H2 = 1, 256, 256, 2
    kx2, kp2 = jax.random.split(krest)
    x2 = jax.random.normal(kx2, (B2, T2, C2), dtype=jnp.float32)
    p2 = make_params(kp2, C2)
    ref2 = reference_attention(x2, *p2, H2)
    out2 = causal_self_attention(x2, *p2, n_head=H2, compute_dtype=jnp.float32)
    out2 = jax.block_until_ready(out2)
    assert out2.shape == (B2, T2, C2)
    assert jnp.allclose(out2, ref2, rtol=2e-3, atol=2e-3), "large-shape kernel mismatch"

    print("KERNEL_OK")
</pallas_src>

<mosaic_0001>
module attributes {stable_mosaic.version = 11 : i64} {
  func.func @_matmul_bias_kernel(%arg0: i32, %arg1: i32, %arg2: i32, %arg3: memref<1x8x32xf32, #tpu.memory_space<vmem>>, %arg4: memref<32x96xf32, #tpu.memory_space<vmem>>, %arg5: memref<1x96xf32, #tpu.memory_space<vmem>>, %arg6: memref<1x8x96xf32, #tpu.memory_space<vmem>>) attributes {dimension_semantics = [#tpu.dimension_semantics<parallel>, #tpu.dimension_semantics<parallel>, #tpu.dimension_semantics<parallel>], iteration_bounds = array<i64: 2, 1, 1>, scalar_prefetch = 0 : i64, scratch_operands = 0 : i64, tpu.core_type = #tpu.core_type<tc>, window_params = [{transform_indices = @transform_0, window_bounds = array<i64: 1, 8, 32>}, {transform_indices = @transform_1, window_bounds = array<i64: 32, 96>}, {transform_indices = @transform_2, window_bounds = array<i64: 1, 96>}, {transform_indices = @transform_3, window_bounds = array<i64: 1, 8, 96>}]} {
    %c0 = arith.constant 0 : index
    %c0_0 = arith.constant 0 : index
    %c0_1 = arith.constant 0 : index
    %0 = vector.load %arg3[%c0, %c0_0, %c0_1] : memref<1x8x32xf32, #tpu.memory_space<vmem>>, vector<1x8x32xf32>
    %1 = vector.shape_cast %0 : vector<1x8x32xf32> to vector<8x32xf32>
    %c0_2 = arith.constant 0 : index
    %c0_3 = arith.constant 0 : index
    %2 = vector.load %arg4[%c0_2, %c0_3] : memref<32x96xf32, #tpu.memory_space<vmem>>, vector<32x96xf32>
    %cst = arith.constant dense<0.000000e+00> : vector<8x96xf32>
    %3 = tpu.matmul %1, %2, %cst {dimension_numbers = #tpu.dot_dimension_numbers<[1], [0], [0], [1], [0, 0, 1, 1], [], []>} : vector<8x32xf32>, vector<32x96xf32>, vector<8x96xf32> -> vector<8x96xf32>
    %c0_4 = arith.constant 0 : index
    %c0_5 = arith.constant 0 : index
    %4 = vector.load %arg5[%c0_4, %c0_5] : memref<1x96xf32, #tpu.memory_space<vmem>>, vector<1x96xf32>
    %5 = vector.broadcast %4 : vector<1x96xf32> to vector<8x96xf32>
    %6 = arith.addf %3, %5 : vector<8x96xf32>
    %c0_6 = arith.constant 0 : index
    %c0_7 = arith.constant 0 : index
    %c0_8 = arith.constant 0 : index
    %7 = vector.load %arg6[%c0_6, %c0_7, %c0_8] : memref<1x8x96xf32, #tpu.memory_space<vmem>>, vector<1x8x96xf32>
    %8 = vector.shape_cast %7 : vector<1x8x96xf32> to vector<8x96xf32>
    %9 = vector.shape_cast %6 : vector<8x96xf32> to vector<1x8x96xf32>
    tpu.vector_store %arg6[%c0_6, %c0_7, %c0_8], %9 {strides = array<i32>} : memref<1x8x96xf32, #tpu.memory_space<vmem>>, vector<1x8x96xf32>,
    return
  }
  func.func @transform_0(%arg0: i32, %arg1: i32, %arg2: i32) -> (i32, i32, i32) {
    %c0_i32 = arith.constant 0 : i32
    %c0_i32_0 = arith.constant 0 : i32
    return %arg0, %arg1, %c0_i32 : i32, i32, i32
  }
  func.func @transform_1(%arg0: i32, %arg1: i32, %arg2: i32) -> (i32, i32) {
    %c0_i32 = arith.constant 0 : i32
    %c0_i32_0 = arith.constant 0 : i32
    return %c0_i32, %arg2 : i32, i32
  }
  func.func @transform_2(%arg0: i32, %arg1: i32, %arg2: i32) -> (i32, i32) {
    %c0_i32 = arith.constant 0 : i32
    %c0_i32_0 = arith.constant 0 : i32
    return %c0_i32, %arg2 : i32, i32
  }
  func.func @transform_3(%arg0: i32, %arg1: i32, %arg2: i32) -> (i32, i32, i32) {
    %c0_i32 = arith.constant 0 : i32
    return %arg0, %arg1, %arg2 : i32, i32, i32
  }
}

</mosaic_0001>

<llo_original>
// kernel: tpu_custom_call.1
$region0: #{tpu_custom_call.1}
  #allocation0 [shape = 'u32[]', space=smem, size = 0x4, offset = 0x4, fixed_abs, tag = 'smem constant byte address 0x4 - core index']
  #allocation1 [shape = 'u32[144,128]{1,0:T(1,128)}', space=vmem, size = 0x12000, scoped, tag = 'internal scratch']
  %s0 = inlined_call_operand.hbm [shape: f32[2,8,32], index: 0, kind: input, shape index: {}]
  %s1 = inlined_call_operand.hbm [shape: f32[32,96], index: 1, kind: input, shape index: {}]
  %s2 = inlined_call_operand.vmem [shape: f32[1,96], index: 2, kind: input, shape index: {}]
  %s3 = inlined_call_operand.hbm [shape: f32[2,8,96], index: 3, kind: output, shape index: {}]
  %s4 = sld [smem:[#allocation0]]
  $region53: #{tpu_custom_call.1} parent=0
    _
  %s6 = ssub.s32 1, %s4
  %s7 = scalar_select 0, %s6, %s4
  $region1: #{tpu_custom_call.1} parent=0
    #allocation2 [shape = 'u8[8192]{0}', space=vmem, size = 0x2000, scoped, tag = 'input window, operand 0']
    #allocation3 [shape = 's32[2]{0}', space=sflag, size = 0x8, scoped, tag = 'scoped memory for tpu_custom_call.1']
    #allocation4 [shape = 's32[2]{0}', space=sflag, size = 0x8, scoped, tag = 'scoped memory for tpu_custom_call.1']
    #allocation5 [shape = 'u8[16384]{0}', space=vmem, size = 0x4000, scoped, tag = 'input window, operand 1, single buffered']
    #allocation6 [shape = 's32[1]{0}', space=sflag, size = 0x4, scoped, tag = 'scoped memory for tpu_custom_call.1']
    #allocation7 [shape = 'u8[8192]{0}', space=vmem, size = 0x2000, scoped, tag = 'output window, operand 0']
    %8 = vsyncpa [#allocation3], 0
    %s9 = scalar_lea.sflag [#allocation3], 1
    %10 = vsyncpa %s9, 0
    %11 = vsyncpa [#allocation6], 0
    %12 = vsyncpa [#allocation4], 0
    %s13 = scalar_lea.sflag [#allocation4], 1
    %14 = vsyncpa %s13, 0
    loop: start=0, step=1, limit=4
    $region2: #{tpu_custom_call.1} parent=1 // loop_pre_header
      _
    $region3: #{tpu_custom_call.1} parent=1 // loop_header
      %s16 = sphi 0, %s20
      %p17 = scmp.ge.s32.totalorder %s16, 4
      %s23 = sphi 0, %s42
      %s24 = sphi 0, %s38
      %s25 = sphi 0, %s34
      %s26 = sphi 0, %s23
      %s27 = sphi 0, %s24
      %s28 = sphi 0, %s25
      %s29 = sphi 0, %s26
      %s30 = sphi 0, %s27
      %s31 = sphi 0, %s28
      %s47 = sphi 0, %s49
      %s50 = sphi 0, %s47
      %s51 = sphi 0, %s50
      %s67 = sphi 0, %s51
      %s73 = sphi 0, %s75
      %s76 = sphi 0, %s73
      %s77 = sphi 0, %s76
      %s93 = sphi 0, %s77
      %s99 = sphi 0, %s101
      %s102 = sphi 0, %s99
      %s103 = sphi 0, %s102
      %s119 = sphi 0, %s103
      %s129 = sphi 0, %s131
      %s132 = sphi 0, %s129
      %s133 = sphi 0, %s132
      %s149 = sphi 0, %s133
    $region4: #{tpu_custom_call.1} parent=1 // loop_header_branch
      %19 = sbr.rel (%p17) target = $region8
    $region5: #{tpu_custom_call.1} parent=1 // loop_body
      %s21 = ssub.s32 %s16, 1
      %s22 = ssub.s32 %s16, 2
      %s32 = sadd.s32 1, %s25
      %p33 = scmp.ge.s32.totalorder %s32, 1
      %s34 = scalar_select %p33, 0, %s32
      %s35 = sadd.s32 1, %s24
      %s36 = scalar_select %p33, %s35, %s24
      %p37 = scmp.ge.s32.totalorder %s36, 1
      %s38 = scalar_select %p37, 0, %s36
      %s39 = sadd.s32 1, %s23
      %s40 = scalar_select %p37, %s39, %s23
      %p41 = scmp.ge.s32.totalorder %s40, 2
      %s42 = scalar_select %p41, 0, %s40
      %s43 = ssub.s32 %s23, %s42
      %s44 = ssub.s32 %s24, %s38
      %s45 = sor.u32 %s43, %s44
      %p46 = scmp.eq.s32.totalorder %s45, 0
      %s48 = sadd.s32 %s47, 1
      %s49 = scalar_select %p46, %s47, %s48
      %p52 = pneg %p46
      %p53 = scmp.eq.s32.totalorder %s16, 1
      %p54 = por %p52, %p53
      %p55 = scmp.ne.s32.totalorder %s47, %s50
      %p56 = scmp.eq.s32.totalorder %s16, 0
      %p57 = por %p55, %p56
      %p58 = scmp.ne.s32.totalorder %s47, %s50
      %p59 = scmp.eq.s32.totalorder %s21, 1
      %p60 = por %p58, %p59
      %p61 = scmp.ne.s32.totalorder %s50, %s51
      %p62 = scmp.eq.s32.totalorder %s21, 0
      %p63 = por %p61, %p62
      %p64 = scmp.ne.s32.totalorder %s50, %s51
      %p65 = scmp.eq.s32.totalorder %s22, 1
      %p66 = por %p64, %p65
      %p68 = scmp.ne.s32.totalorder %s51, %s67
      %p69 = scmp.eq.s32.totalorder %s22, 0
      %p70 = por %p68, %p69
      %s71 = ssub.s32 %s25, %s34
      %p72 = scmp.eq.s32.totalorder %s71, 0
      %s74 = sadd.s32 %s73, 1
      %s75 = scalar_select %p72, %s73, %s74
      %p78 = pneg %p72
      %p79 = scmp.eq.s32.totalorder %s16, 1
      %p80 = por %p78, %p79
      %p81 = scmp.ne.s32.totalorder %s73, %s76
      %p82 = scmp.eq.s32.totalorder %s16, 0
      %p83 = por %p81, %p82
      %p84 = scmp.ne.s32.totalorder %s73, %s76
      %p85 = scmp.eq.s32.totalorder %s21, 1
      %p86 = por %p84, %p85
      %p87 = scmp.ne.s32.totalorder %s76, %s77
      %p88 = scmp.eq.s32.totalorder %s21, 0
      %p89 = por %p87, %p88
      %p90 = scmp.ne.s32.totalorder %s76, %s77
      %p91 = scmp.eq.s32.totalorder %s22, 1
      %p92 = por %p90, %p91
      %p94 = scmp.ne.s32.totalorder %s77, %s93
      %p95 = scmp.eq.s32.totalorder %s22, 0
      %p96 = por %p94, %p95
      %s97 = ssub.s32 %s25, %s34
      %p98 = scmp.eq.s32.totalorder %s97, 0
      %s100 = sadd.s32 %s99, 1
      %s101 = scalar_select %p98, %s99, %s100
      %p104 = pneg %p98
      %p105 = scmp.eq.s32.totalorder %s16, 1
      %p106 = por %p104, %p105
      %p107 = scmp.ne.s32.totalorder %s99, %s102
      %p108 = scmp.eq.s32.totalorder %s16, 0
      %p109 = por %p107, %p108
      %p110 = scmp.ne.s32.totalorder %s99, %s102
      %p111 = scmp.eq.s32.totalorder %s21, 1
      %p112 = por %p110, %p111
      %p113 = scmp.ne.s32.totalorder %s102, %s103
      %p114 = scmp.eq.s32.totalorder %s21, 0
      %p115 = por %p113, %p114
      %p116 = scmp.ne.s32.totalorder %s102, %s103
      %p117 = scmp.eq.s32.totalorder %s22, 1
      %p118 = por %p116, %p117
      %p120 = scmp.ne.s32.totalorder %s103, %s119
      %p121 = scmp.eq.s32.totalorder %s22, 0
      %p122 = por %p120, %p121
      %s123 = ssub.s32 %s23, %s42
      %s124 = ssub.s32 %s24, %s38
      %s125 = sor.u32 %s123, %s124
      %s126 = ssub.s32 %s25, %s34
      %s127 = sor.u32 %s125, %s126
      %p128 = scmp.eq.s32.totalorder %s127, 0
      %s130 = sadd.s32 %s129, 1
      %s131 = scalar_select %p128, %s129, %s130
      %p134 = pneg %p128
      %p135 = scmp.eq.s32.totalorder %s16, 1
      %p136 = por %p134, %p135
      %p137 = scmp.ne.s32.totalorder %s129, %s132
      %p138 = scmp.eq.s32.totalorder %s16, 0
      %p139 = por %p137, %p138
      %p140 = scmp.ne.s32.totalorder %s129, %s132
      %p141 = scmp.eq.s32.totalorder %s21, 1
      %p142 = por %p140, %p141
      %p143 = scmp.ne.s32.totalorder %s132, %s133
      %p144 = scmp.eq.s32.totalorder %s21, 0
      %p145 = por %p143, %p144
      %p146 = scmp.ne.s32.totalorder %s132, %s133
      %p147 = scmp.eq.s32.totalorder %s22, 1
      %p148 = por %p146, %p147
      %p150 = scmp.ne.s32.totalorder %s133, %s149
      %p151 = scmp.eq.s32.totalorder %s22, 0
      %p152 = por %p150, %p151
      %p153 = scmp.le.s32.totalorder 1, %s16
      %p154 = scmp.lt.s32.totalorder %s16, 3
      %p155 = pnand %p153, %p154
      %p156 = pneg %p155
      // Predicated region
      $region9: #{tpu_custom_call.1} parent=5 // pred_check
        _
      $region10: #{tpu_custom_call.1} parent=5 // pred_check_branch
        %158 = sbr.rel (%p155) target = $region12
      $region11: #{tpu_custom_call.1} parent=5 // pred_region
        %s159 = ssub.s32 %s16, 1
        // Predicated region
        $region13: #{tpu_custom_call.1} parent=11 // pred_check
          %p160 = pneg %p89
        $region14: #{tpu_custom_call.1} parent=11 // pred_check_branch
          %162 = sbr.rel (%p160) target = $region16
        $region15: #{tpu_custom_call.1} parent=11 // pred_region
          %s164 = ssub.s32 512, 512
          %165 = vsyncadd [#allocation6], %s164
          %s166 = smul.addr %s28, 128
          %s167 = scalar_lea.hbm %s1, %s166
          %s168 = sshll.u32 [#allocation5], 4
          %s169 = int_to_ptr.vmem [resolvable:$true] %s168
          %174 = dma.hbm_to_vmem [thread:$0]  %s167, 512, %s169, [#allocation6], 128, 128, 8
        $region16: #{tpu_custom_call.1} parent=11 // pred_fallthru
          _
        // Predicated region
        $region17: #{tpu_custom_call.1} parent=11 // pred_check
          %p175 = pneg %p115
        $region18: #{tpu_custom_call.1} parent=11 // pred_check_branch
          %177 = sbr.rel (%p175) target = $region20
        $region19: #{tpu_custom_call.1} parent=11 // pred_region
          %p178 = scmp.lt.s32.totalorder %s28, 0
          %s179 = scalar_select %p178, %s28, 0
          %s180 = scalar_lea.vmem %s2, %s179
        $region20: #{tpu_custom_call.1} parent=11 // pred_fallthru
          _
      $region12: #{tpu_custom_call.1} parent=5 // pred_fallthru
        _
      %p181 = scmp.lt.s32.totalorder %s16, 2
      // Predicated region
      $region21: #{tpu_custom_call.1} parent=5 // pred_check
        %p182 = pneg %p181
      $region22: #{tpu_custom_call.1} parent=5 // pred_check_branch
        %184 = sbr.rel (%p182) target = $region24
      $region23: #{tpu_custom_call.1} parent=5 // pred_region
        // Predicated region
        $region25: #{tpu_custom_call.1} parent=23 // pred_check
          %p185 = pneg %p57
        $region26: #{tpu_custom_call.1} parent=23 // pred_check_branch
          %187 = sbr.rel (%p185) target = $region28
        $region27: #{tpu_custom_call.1} parent=23 // pred_region
          %s188 = sand.u32 %s47, 1
          %s189 = scalar_lea.sflag [#allocation3], %s188
          %s190 = sand.u32 %s47, 1
          %s191 = smul.addr %s190, 8
          %s192 = scalar_lea.vmem [#allocation2], %s191
          %s194 = ssub.s32 128, 128
          %195 = vsyncadd %s189, %s194
          %s196 = sadd.s32 %s24, %s23
          %s197 = smul.addr %s196, 128
          %s198 = scalar_lea.hbm %s0, %s197
          %s200 = sshll.u32 %s192, 4
          %s201 = int_to_ptr.vmem [resolvable:$true] %s200
          %203 = dma.hbm_to_vmem [thread:$0]  %s198, 128, %s201, %s189
        $region28: #{tpu_custom_call.1} parent=23 // pred_fallthru
          _
      $region24: #{tpu_custom_call.1} parent=5 // pred_fallthru
        _
      %p204 = scmp.le.s32.totalorder 1, %s16
      %p205 = scmp.lt.s32.totalorder %s16, 3
      %p206 = pnand %p204, %p205
      %p207 = pneg %p206
      // Predicated region
      $region29: #{tpu_custom_call.1} parent=5 // pred_check
        _
      $region30: #{tpu_custom_call.1} parent=5 // pred_check_branch
        %209 = sbr.rel (%p206) target = $region32
      $region31: #{tpu_custom_call.1} parent=5 // pred_region
        %s210 = ssub.s32 %s16, 1
        %s211 = sand.u32 %s50, 1
        %s212 = scalar_lea.sflag [#allocation3], %s211
        %s213 = sand.u32 %s50, 1
        %s214 = smul.addr %s213, 8
        %s215 = scalar_lea.vmem [#allocation2], %s214
        // Predicated region
        $region33: #{tpu_custom_call.1} parent=31 // pred_check
          %p216 = pneg %p63
        $region34: #{tpu_custom_call.1} parent=31 // pred_check_branch
          %218 = sbr.rel (%p216) target = $region36
        $region35: #{tpu_custom_call.1} parent=31 // pred_region
          %219 = dma.done %s212, 128
        $region36: #{tpu_custom_call.1} parent=31 // pred_fallthru
          _
        // Predicated region
        $region37: #{tpu_custom_call.1} parent=31 // pred_check
          %p220 = pneg %p89
        $region38: #{tpu_custom_call.1} parent=31 // pred_check_branch
          %222 = sbr.rel (%p220) target = $region40
        $region39: #{tpu_custom_call.1} parent=31 // pred_region
          %223 = dma.done [#allocation6], 512
        $region40: #{tpu_custom_call.1} parent=31 // pred_fallthru
          _
        %s224 = sand.u32 %s50, 1
        %s225 = scalar_lea.sflag [#allocation3], %s224
        %s226 = sand.u32 %s50, 1
        %s227 = smul.addr %s226, 8
        %s228 = scalar_lea.vmem [#allocation2], %s227
        %p229 = pneg %p63
        %p230 = pneg %p60
        %p231 = pneg %p89
        %p232 = pneg %p86
        %p233 = scmp.lt.s32.totalorder %s28, 0
        %s234 = scalar_select %p233, %s28, 0
        %s235 = scalar_lea.vmem %s2, %s234
        %p236 = pneg %p115
        %p237 = pneg %p112
        %p238 = pneg %p145
        %p239 = pneg %p142
        %s240 = sand.u32 %s132, 1
        %s241 = scalar_lea.sflag [#allocation4], %s240
        %s242 = sand.u32 %s132, 1
        %s243 = smul.addr %s242, 8
        %s244 = scalar_lea.vmem [#allocation7], %s243
        %p245 = scmp.lt.s32.totalorder %s28, 0
        %s246 = scalar_select %p245, %s28, 0
        %s247 = scalar_lea.vmem %s2, %s246
        %v248 = vld [vmem:[%s215] sm:$0xff]
        %v249 = vld [vmem:[#allocation5] sm:$0xff]
        %v250 = vld [vmem:[#allocation5 + $0x8] sm:$0xff]
        %v251 = vld [vmem:[#allocation5 + $0x10] sm:$0xff]
        %v252 = vld [vmem:[#allocation5 + $0x18] sm:$0xff]
        %v253 = vld [vmem:[%s247] sm:$0x1]
        %v255 = vlaneseq
        %v256 = vshrl.u32 %v255, 7
        %v257 = vsub.s32 0, %v256
        %v258 = vrot.slane %v253, %v257
        %vm260 = vcmask 261120
        %v262 = vsel %vm260, %v248, 0
        %264 = vmatprep.subr.mxu0 0.0
        %265 = vmatpush1.msra.mxu0 %v249
        %266 = vmatprep.subr.mxu0 0.0
        %267 = vmatpush1.msra.mxu0 %v250
        %268 = vmatprep.subr.mxu0 0.0
        %269 = vmatpush1.msra.mxu0 %v251
        %270 = vmatprep.subr.mxu0 0.0
        %271 = vmatpush1.msra.mxu0 %v252
        %272 = vmatprep.subr.mxu0 0.0
        %273 = vmatpush1.msra.mxu0 0.0
        %274 = vmatprep.subr.mxu0 0.0
        %275 = vmatpush1.msra.mxu0 0.0
        %276 = vmatprep.subr.mxu0 0.0
        %277 = vmatpush1.msra.mxu0 0.0
        %278 = vmatprep.subr.mxu0 0.0
        %279 = vmatpush1.msra.mxu0 0.0
        %280 = vmatprep.subr.mxu0 0.0
        %281 = vmatpush1.msra.mxu0 0.0
        %282 = vmatprep.subr.mxu0 0.0
        %283 = vmatpush1.msra.mxu0 0.0
        %284 = vmatprep.subr.mxu0 0.0
        %285 = vmatpush1.msra.mxu0 0.0
        %286 = vmatprep.subr.mxu0 0.0
        %287 = vmatpush1.msra.mxu0 0.0
        %288 = vmatprep.subr.mxu0 0.0
        %289 = vmatpush1.msra.mxu0 0.0
        %290 = vmatprep.subr.mxu0 0.0
        %291 = vmatpush1.msra.mxu0 0.0
        %292 = vmatprep.subr.mxu0 0.0
        %293 = vmatpush1.msra.mxu0 0.0
        %294 = vmatprep.subr.mxu0 0.0
        %295 = vmatpush1.msra.mxu0 0.0
        %296 = vmatprep.subr.mxu0 0.0
        %297 = vmatpush1.msra.mxu0 0.0
        %298 = vmatprep.subr.mxu0 0.0
        %299 = vmatpush1.msra.mxu0 0.0
        %300 = vmatprep.subr.mxu0 0.0
        %301 = vmatpush1.msra.mxu0 0.0
        %302 = vmatprep.subr.mxu0 0.0
        %303 = vmatpush1.msra.mxu0 0.0
        %304 = vmatprep.subr.mxu0 0.0
        %305 = vmatpush1.msra.mxu0 0.0
        %306 = vmatprep.subr.mxu0 0.0
        %307 = vmatpush1.msra.mxu0 0.0
        %308 = vmatprep.subr.mxu0 0.0
        %309 = vmatpush1.msra.mxu0 0.0
        %310 = vmatprep.subr.mxu0 0.0
        %311 = vmatpush1.msra.mxu0 0.0
        %312 = vmatprep.subr.mxu0 0.0
        %313 = vmatpush1.msra.mxu0 0.0
        %314 = vmatprep.subr.mxu0 0.0
        %315 = vmatpush1.msra.mxu0 0.0
        %316 = vmatprep.subr.mxu0 0.0
        %317 = vmatpush1.msra.mxu0 0.0
        %318 = vmatprep.subr.mxu0 0.0
        %319 = vmatpush1.msra.mxu0 0.0
        %320 = vmatprep.subr.mxu0 0.0
        %321 = vmatpush1.msra.mxu0 0.0
        %322 = vmatprep.subr.mxu0 0.0
        %323 = vmatpush1.msra.mxu0 0.0
        %324 = vmatprep.subr.mxu0 0.0
        %325 = vmatpush1.msra.mxu0 0.0
        %326 = vmatprep.subr.mxu0 0.0
        %327 = vmatpush1.msra.mxu0 0.0
        %328 = vmatprep.mubr.f32.mxu0 0.0
        %329 = vmatmul.mubr.f32.gmra.mrb[0].mxu0 %v262
        %v330 = vpop.f32.mrb[0].mxu0
        %v331 = vadd.f32 %v258, %v330
        %v332 = vpop.f32.mrb[0].mxu0
        %333 = vdwg.mxu0
        %vm334 = vcmask 785408
        %335 = vst.msk [vmem:[%s244] sm:$0xff] %vm334, %v331
        %s336 = sand.u32 %s132, 1
        %s337 = scalar_lea.sflag [#allocation4], %s336
        %s338 = sand.u32 %s132, 1
        %s339 = smul.addr %s338, 8
        %s340 = scalar_lea.vmem [#allocation7], %s339
        // Predicated region
        $region41: #{tpu_custom_call.1} parent=31 // pred_check
          %p341 = pneg %p142
        $region42: #{tpu_custom_call.1} parent=31 // pred_check_branch
          %343 = sbr.rel (%p341) target = $region44
        $region43: #{tpu_custom_call.1} parent=31 // pred_region
          %s345 = ssub.s32 128, 128
          %346 = vsyncadd %s337, %s345
          %s347 = sadd.s32 %s28, %s27
          %s348 = sadd.s32 %s347, %s26
          %s349 = smul.addr %s348, 128
          %s350 = scalar_lea.hbm %s3, %s349
          %s352 = sshll.u32 %s340, 4
          %s353 = int_to_ptr.vmem [resolvable:$true] %s352
          %355 = dma.vmem_to_hbm [thread:$0]  %s353, 128, %s350, %s337
        $region44: #{tpu_custom_call.1} parent=31 // pred_fallthru
          _
      $region32: #{tpu_custom_call.1} parent=5 // pred_fallthru
        _
      %p356 = scmp.le.s32.totalorder 2, %s16
      // Predicated region
      $region45: #{tpu_custom_call.1} parent=5 // pred_check
        %p357 = pneg %p356
      $region46: #{tpu_custom_call.1} parent=5 // pred_check_branch
        %359 = sbr.rel (%p357) target = $region48
      $region47: #{tpu_custom_call.1} parent=5 // pred_region
        %s360 = ssub.s32 %s16, 2
        // Predicated region
        $region49: #{tpu_custom_call.1} parent=47 // pred_check
          %p361 = pneg %p148
        $region50: #{tpu_custom_call.1} parent=47 // pred_check_branch
          %363 = sbr.rel (%p361) target = $region52
        $region51: #{tpu_custom_call.1} parent=47 // pred_region
          %s364 = sand.u32 %s133, 1
          %s365 = scalar_lea.sflag [#allocation4], %s364
          %s366 = sand.u32 %s133, 1
          %s367 = smul.addr %s366, 8
          %s368 = scalar_lea.vmem [#allocation7], %s367
          %369 = dma.done %s365, 128
        $region52: #{tpu_custom_call.1} parent=47 // pred_fallthru
          _
      $region48: #{tpu_custom_call.1} parent=5 // pred_fallthru
        _
    $region6: #{tpu_custom_call.1} parent=1 // loop_footer
      %s20 = sadd.s32 1, %s16
    $region7: #{tpu_custom_call.1} parent=1 // loop_footer_branch
      %15 = sbr.rel target = $region3
    $region8: #{tpu_custom_call.1} parent=1 // loop_exit
      _
    %370 = vsyncpa [#allocation3], 1
    %s371 = scalar_lea.sflag [#allocation3], 1
    %372 = vsyncpa %s371, 1
    %373 = vsyncpa [#allocation6], 1
    %374 = vsyncpa [#allocation4], 1
    %s375 = scalar_lea.sflag [#allocation4], 1
    %376 = vsyncpa %s375, 1

</llo_original>
